<compile_context>
chip_gen: v6e
topology: v6e:2x2x1
jax: 0.10.0
libtpu: 0.0.40
codegen_flags: <defaults>
</compile_context>

<pallas_src>
import functools
import math

import numpy as np
import jax
import jax.numpy as jnp
from jax.experimental import pallas as pl
from jax.experimental.pallas import tpu as pltpu


def _round_up(x, m):
    return ((x + m - 1) // m) * m


def _cdiv(a, b):
    return (a + b - 1) // b


def _cparams(dims, vmem_mb=32):
    return pltpu.CompilerParams(dimension_semantics=dims,
                                vmem_limit_bytes=vmem_mb * 1024 * 1024)


# ----------------------------- Conv1d (stride=1), halo-tiled ----------------------

def _conv1d_kernel(a_ref, b_ref, w_ref, bias_ref, o_ref, *, k, act, glu_half):
    # a_ref: (1, tl, Cin) current tile, b_ref: (1, tl, Cin) next tile (halo source).
    # w_ref: (k*Cin, Ncols) resident, bias_ref: (1, Ncols), o_ref: (1, tl, Cout).
    tl = o_ref.shape[1]
    x2 = jnp.concatenate([a_ref[0], b_ref[0]], axis=0)                   # (2*tl, Cin)
    # im2col in VMEM: one MXU matmul with contraction k*Cin instead of k tiny dots.
    xc = jnp.concatenate([x2[j:j + tl, :] for j in range(k)], axis=1)    # (tl, k*Cin)
    y = jnp.dot(xc, w_ref[...], preferred_element_type=jnp.float32) + bias_ref[...]
    if act == "relu":
        y = jnp.maximum(y, 0.0)
    elif act == "glu":
        y = y[:, :glu_half] * jax.nn.sigmoid(y[:, glu_half:])            # 128-aligned split
    o_ref[0] = y.astype(o_ref.dtype)


def conv1d_nlc(x, conv, padding, out_dtype=jnp.bfloat16, tl_target=256):
    """Stride-1 Conv1d on NLC data with channel-padded, 128-lane-dense output.

    `conv` is a prepared dict from _prep_conv (bf16 weight (k*Cin, Ncols), f32 bias).
    """
    B, L, Cin = x.shape
    k = conv["k"]
    assert conv["w"].shape[0] == k * Cin, (conv["w"].shape, k, Cin)
    Lout = L + 2 * padding - k + 1
    tl = min(tl_target, _round_up(Lout, 8))
    n_tiles = _cdiv(Lout, tl)
    total = (n_tiles + 1) * tl          # extra tile so the "next" block is always valid
    xp = jnp.pad(x.astype(jnp.bfloat16),
                 ((0, 0), (padding, total - padding - L), (0, 0)))
    ncols = conv["ncols"]
    cout = conv["cout"]
    kernel = functools.partial(_conv1d_kernel, k=k, act=conv["act"],
                               glu_half=conv["glu_half"])
    out = pl.pallas_call(
        kernel,
        out_shape=jax.ShapeDtypeStruct((B, n_tiles * tl, cout), out_dtype),
        grid=(B, n_tiles),
        in_specs=[
            pl.BlockSpec((1, tl, Cin), lambda b, l: (b, l, 0)),
            pl.BlockSpec((1, tl, Cin), lambda b, l: (b, l + 1, 0)),      # halo tile
            pl.BlockSpec((k * Cin, ncols), lambda b, l: (0, 0)),
            pl.BlockSpec((1, ncols), lambda b, l: (0, 0)),
        ],
        out_specs=pl.BlockSpec((1, tl, cout), lambda b, l: (b, l, 0)),
        compiler_params=_cparams(("parallel", "parallel")),
    )(xp, xp, conv["w"], conv["b"])
    return out[:, :Lout, :]


# ----------------------------- fused q/k/v projection -----------------------------

def _qkv_kernel(x_ref, wq_ref, wk_ref, wv_ref, bq_ref, bk_ref, bv_ref,
                q_ref, k_ref, v_ref):
    x = x_ref[...].astype(jnp.bfloat16)
    q_ref[...] = (jnp.dot(x, wq_ref[...], preferred_element_type=jnp.float32)
                  + bq_ref[...]).astype(q_ref.dtype)
    k_ref[...] = (jnp.dot(x, wk_ref[...], preferred_element_type=jnp.float32)
                  + bk_ref[...]).astype(k_ref.dtype)
    v_ref[...] = (jnp.dot(x, wv_ref[...], preferred_element_type=jnp.float32)
                  + bv_ref[...]).astype(v_ref.dtype)


def qkv_proj(x, wq, wk, wv, bq, bk, bv, tm):
    M, H = x.shape
    assert M % tm == 0
    x_spec = pl.BlockSpec((tm, H), lambda i: (i, 0))
    w_spec = pl.BlockSpec((H, H), lambda i: (0, 0))
    b_spec = pl.BlockSpec((1, H), lambda i: (0, 0))
    o_spec = pl.BlockSpec((tm, H), lambda i: (i, 0))
    return pl.pallas_call(
        _qkv_kernel,
        out_shape=tuple(jax.ShapeDtypeStruct((M, H), jnp.bfloat16) for _ in range(3)),
        grid=(M // tm,),
        in_specs=[x_spec, w_spec, w_spec, w_spec, b_spec, b_spec, b_spec],
        out_specs=(o_spec, o_spec, o_spec),
        compiler_params=_cparams(("parallel",)),
    )(x, wq, wk, wv, bq, bk, bv)


# ----------------------------- flash-style causal multi-head attention ------------

def _causal_mha_kernel(q_ref, k_ref, v_ref, o_ref, m_sc, l_sc, acc_sc, *, nh, dh, scale):
    t = q_ref.shape[1]
    qi = pl.program_id(1)
    ki = pl.program_id(2)

    @pl.when(ki == 0)
    def _():
        m_sc[...] = jnp.full_like(m_sc, -1e30)
        l_sc[...] = jnp.zeros_like(l_sc)
        acc_sc[...] = jnp.zeros_like(acc_sc)

    # Tiles fully above the diagonal are skipped (their K/V blocks are also not
    # re-DMA'd thanks to the clamped index_map).
    @pl.when(ki <= qi)
    def _():
        q = q_ref[0]                                   # (t, H) bf16
        kk = k_ref[0]
        vv = v_ref[0]
        row = jax.lax.broadcasted_iota(jnp.int32, (t, t), 0) + qi * t
        col = jax.lax.broadcasted_iota(jnp.int32, (t, t), 1) + ki * t
        masked = col > row
        for h in range(nh):                            # static loop over heads
            sl = slice(h * dh, (h + 1) * dh)
            s = jax.lax.dot_general(q[:, sl], kk[:, sl], (((1,), (1,)), ((), ())),
                                    preferred_element_type=jnp.float32) * scale
            s = jnp.where(masked, -1e30, s)            # finite mask constant
            m_prev = m_sc[:, h:h + 1]
            m_new = jnp.maximum(m_prev, jnp.max(s, axis=-1, keepdims=True))
            alpha = jnp.exp(m_prev - m_new)
            p = jnp.exp(s - m_new)
            l_sc[:, h:h + 1] = alpha * l_sc[:, h:h + 1] + jnp.sum(p, axis=-1,
                                                                  keepdims=True)
            acc_sc[:, sl] = alpha * acc_sc[:, sl] + jnp.dot(
                p.astype(jnp.bfloat16), vv[:, sl], preferred_element_type=jnp.float32)
            m_sc[:, h:h + 1] = m_new

    @pl.when(ki == pl.num_programs(2) - 1)
    def _():
        inv = pl.reciprocal(l_sc[...], approx=True)    # (t, nh)
        parts = [acc_sc[:, h * dh:(h + 1) * dh] * inv[:, h:h + 1] for h in range(nh)]
        o_ref[0] = jnp.concatenate(parts, axis=1).astype(o_ref.dtype)


def causal_mha(q, k, v, nh, t):
    """q, k, v: (B, Lp, H) bf16, heads interleaved along the feature dim."""
    B, Lp, H = q.shape
    dh = H // nh
    assert nh * dh == H and Lp % t == 0
    scale = 1.0 / math.sqrt(dh)
    n = Lp // t
    q_spec = pl.BlockSpec((1, t, H), lambda b, qi, ki: (b, qi, 0))
    kv_spec = pl.BlockSpec((1, t, H), lambda b, qi, ki: (b, jnp.minimum(qi, ki), 0))
    return pl.pallas_call(
        functools.partial(_causal_mha_kernel, nh=nh, dh=dh, scale=scale),
        out_shape=jax.ShapeDtypeStruct((B, Lp, H), jnp.bfloat16),
        grid=(B, n, n),
        in_specs=[q_spec, kv_spec, kv_spec],
        out_specs=pl.BlockSpec((1, t, H), lambda b, qi, ki: (b, qi, 0)),
        scratch_shapes=[pltpu.VMEM((t, nh), jnp.float32),
                        pltpu.VMEM((t, nh), jnp.float32),
                        pltpu.VMEM((t, H), jnp.float32)],
        compiler_params=_cparams(("parallel", "parallel", "arbitrary")),
    )(q, k, v)


# ----------------------------- simple fused row-wise linear -----------------------

def _linear_kernel(x_ref, w_ref, b_ref, o_ref):
    o_ref[...] = (jnp.dot(x_ref[...].astype(jnp.bfloat16), w_ref[...],
                          preferred_element_type=jnp.float32)
                  + b_ref[...]).astype(o_ref.dtype)


def linear(x, w, b, tm, out_dtype=jnp.float32):
    M, K = x.shape
    K2, N = w.shape
    assert K == K2 and M % tm == 0
    return pl.pallas_call(
        _linear_kernel,
        out_shape=jax.ShapeDtypeStruct((M, N), out_dtype),
        grid=(M // tm,),
        in_specs=[pl.BlockSpec((tm, K), lambda i: (i, 0)),
                  pl.BlockSpec((K, N), lambda i: (0, 0)),
                  pl.BlockSpec((1, N), lambda i: (0, 0))],
        out_specs=pl.BlockSpec((tm, N), lambda i: (i, 0)),
        compiler_params=_cparams(("parallel",)),
    )(x, w, b)


# ----------------------------- out_proj + residual + LayerNorm --------------------

def _out_res_ln_kernel(o_ref_in, w_ref, b_ref, r_ref, g_ref, be_ref, out_ref, *, eps):
    y = jnp.dot(o_ref_in[...], w_ref[...], preferred_element_type=jnp.float32) + b_ref[...]
    z = r_ref[...] + y
    mean = jnp.mean(z, axis=-1, keepdims=True)
    zc = z - mean
    var = jnp.mean(zc * zc, axis=-1, keepdims=True)
    out_ref[...] = (zc * jax.lax.rsqrt(var + eps) * g_ref[...] + be_ref[...]).astype(out_ref.dtype)


def out_res_ln(o, w, b, residual, gamma, beta, tm, eps=1e-5):
    M, H = o.shape
    assert M % tm == 0 and residual.shape == (M, H)
    return pl.pallas_call(
        functools.partial(_out_res_ln_kernel, eps=eps),
        out_shape=jax.ShapeDtypeStruct((M, H), jnp.float32),
        grid=(M // tm,),
        in_specs=[pl.BlockSpec((tm, H), lambda i: (i, 0)),
                  pl.BlockSpec((H, H), lambda i: (0, 0)),
                  pl.BlockSpec((1, H), lambda i: (0, 0)),
                  pl.BlockSpec((tm, H), lambda i: (i, 0)),
                  pl.BlockSpec((1, H), lambda i: (0, 0)),
                  pl.BlockSpec((1, H), lambda i: (0, 0))],
        out_specs=pl.BlockSpec((tm, H), lambda i: (i, 0)),
        compiler_params=_cparams(("parallel",)),
    )(o, w, b, residual, gamma, beta)


# ----------------------------- FFN + residual + LayerNorm -------------------------

def _ffn_ln_kernel(x_ref, w1_ref, b1_ref, w2_ref, b2_ref, g_ref, be_ref, o_ref, *, eps):
    x = x_ref[...]
    h = jnp.dot(x.astype(jnp.bfloat16), w1_ref[...],
                preferred_element_type=jnp.float32) + b1_ref[...]
    h = jnp.maximum(h, 0.0)                                # 2H intermediate stays in VMEM
    y = jnp.dot(h.astype(jnp.bfloat16), w2_ref[...],
                preferred_element_type=jnp.float32) + b2_ref[...]
    z = x + y
    mean = jnp.mean(z, axis=-1, keepdims=True)
    zc = z - mean
    var = jnp.mean(zc * zc, axis=-1, keepdims=True)
    o_ref[...] = (zc * jax.lax.rsqrt(var + eps) * g_ref[...] + be_ref[...]).astype(o_ref.dtype)


def ffn_res_ln(x, w1, b1, w2, b2, gamma, beta, tm, eps=1e-5):
    M, D = x.shape
    D2 = w1.shape[1]
    assert w2.shape == (D2, D) and M % tm == 0
    return pl.pallas_call(
        functools.partial(_ffn_ln_kernel, eps=eps),
        out_shape=jax.ShapeDtypeStruct((M, D), jnp.float32),
        grid=(M // tm,),
        in_specs=[pl.BlockSpec((tm, D), lambda i: (i, 0)),
                  pl.BlockSpec((D, D2), lambda i: (0, 0)),
                  pl.BlockSpec((1, D2), lambda i: (0, 0)),
                  pl.BlockSpec((D2, D), lambda i: (0, 0)),
                  pl.BlockSpec((1, D), lambda i: (0, 0)),
                  pl.BlockSpec((1, D), lambda i: (0, 0)),
                  pl.BlockSpec((1, D), lambda i: (0, 0))],
        out_specs=pl.BlockSpec((tm, D), lambda i: (i, 0)),
        compiler_params=_cparams(("parallel",)),
    )(x, w1, b1, w2, b2, gamma, beta)


# ----------------------------- linear interpolation (align_corners=False) ---------

def _lerp_kernel(a_ref, b_ref, w_ref, o_ref):
    w = w_ref[...]
    o_ref[...] = (a_ref[...] + w * (b_ref[...] - a_ref[...])).astype(o_ref.dtype)


def linear_interpolate_nlc(y_nlc, t_out):
    """(B, L, C) -> (B, t_out, C); F.interpolate(mode='linear', align_corners=False)."""
    B, L, C = y_nlc.shape
    scale = L / t_out
    dst = np.arange(t_out, dtype=np.float64)
    src = np.maximum((dst + 0.5) * scale - 0.5, 0.0)
    i0 = np.minimum(np.floor(src).astype(np.int64), L - 1)
    i1 = np.minimum(i0 + 1, L - 1)
    lam = (src - i0).astype(np.float32)
    y0 = y_nlc[:, jnp.asarray(i0, dtype=jnp.int32), :].reshape(B * t_out, C)
    y1 = y_nlc[:, jnp.asarray(i1, dtype=jnp.int32), :].reshape(B * t_out, C)
    w = jnp.broadcast_to(jnp.asarray(lam)[None, :, None], (B, t_out, 1)).reshape(B * t_out, 1)
    M = B * t_out
    tm = min(512, _round_up(M, 8))
    Mp = _round_up(M, tm)
    y0p = jnp.pad(y0, ((0, Mp - M), (0, 0))).astype(jnp.float32)
    y1p = jnp.pad(y1, ((0, Mp - M), (0, 0))).astype(jnp.float32)
    wp = jnp.pad(w, ((0, Mp - M), (0, 0))).astype(jnp.float32)
    out = pl.pallas_call(
        _lerp_kernel,
        out_shape=jax.ShapeDtypeStruct((Mp, C), jnp.float32),
        grid=(Mp // tm,),
        in_specs=[pl.BlockSpec((tm, C), lambda i: (i, 0)),
                  pl.BlockSpec((tm, C), lambda i: (i, 0)),
                  pl.BlockSpec((tm, 1), lambda i: (i, 0))],
        out_specs=pl.BlockSpec((tm, C), lambda i: (i, 0)),
        compiler_params=_cparams(("parallel",)),
    )(y0p, y1p, wp)
    return out[:M].reshape(B, t_out, C)


# ----------------------------- parameter init (PyTorch layout) --------------------

def _init_linear(key, in_dim, out_dim, scale=0.05):
    k1, k2 = jax.random.split(key)
    w = jax.random.normal(k1, (out_dim, in_dim), jnp.float32) * scale
    b = jax.random.normal(k2, (out_dim,), jnp.float32) * scale
    return w, b


def _init_conv(key, c_out, c_in, k, scale=0.05):
    k1, k2 = jax.random.split(key)
    w = jax.random.normal(k1, (c_out, c_in, k), jnp.float32) * scale
    b = jax.random.normal(k2, (c_out,), jnp.float32) * scale
    return w, b


def init_cleanspecnet_params(key, cfg):
    C = cfg["input_channels"]
    nc = cfg["num_conv_layers"]
    k = cfg["kernel_size"]
    ch = cfg["conv_hidden_dim"]
    H = cfg["hidden_dim"]
    na = cfg["num_attention_layers"]
    keys = iter(jax.random.split(key, 8 + 2 * nc + 4 * na))
    p = {}
    p["input_w"], p["input_b"] = _init_conv(next(keys), C, C, 3)
    conv_layers = []
    cin = C
    for _ in range(nc):
        w1, b1 = _init_conv(next(keys), ch, cin, k)
        w2, b2 = _init_conv(next(keys), 2 * ch, ch, k)
        conv_layers.append(dict(w1=w1, b1=b1, w2=w2, b2=b2))
        cin = ch
    p["conv_layers"] = conv_layers
    p["proj_w"], p["proj_b"] = _init_linear(next(keys), ch, H)
    attn_layers = []
    for _ in range(na):
        in_w, in_b = _init_linear(next(keys), H, 3 * H)
        out_w, out_b = _init_linear(next(keys), H, H)
        l1_w, l1_b = _init_linear(next(keys), H, 2 * H)
        l2_w, l2_b = _init_linear(next(keys), 2 * H, H)
        attn_layers.append(dict(
            in_proj_w=in_w, in_proj_b=in_b, out_proj_w=out_w, out_proj_b=out_b,
            lin1_w=l1_w, lin1_b=l1_b, lin2_w=l2_w, lin2_b=l2_b,
            ln1_g=jnp.ones((H,), jnp.float32), ln1_b=jnp.zeros((H,), jnp.float32),
            ln2_g=jnp.ones((H,), jnp.float32), ln2_b=jnp.zeros((H,), jnp.float32)))
    p["attn_layers"] = attn_layers
    p["out_w"], p["out_b"] = _init_conv(next(keys), C, H, 3)
    return p


# ----------------------------- one-time parameter preparation ---------------------

def _prep_conv(w, b, cin_arr, act):
    """PyTorch conv weight (Cout, Cin, k) -> (k*cin_arr, Ncols) bf16, tap-major rows,
    zero-padded input channels, 128-padded / GLU-rearranged output columns."""
    w = np.asarray(w, np.float32)
    b = np.asarray(b, np.float32)
    Cout, Cin, k = w.shape
    assert Cin <= cin_arr
    if act == "glu":
        half = Cout // 2
        half_p = _round_up(half, 128)
        ncols = 2 * half_p
        cols = np.concatenate([np.arange(half), half_p + np.arange(half)])
        cout_block, glu_half = half_p, half_p
    else:
        ncols = _round_up(Cout, 128)
        cols = np.arange(Cout)
        cout_block, glu_half = ncols, 0
    wf = np.zeros((k, cin_arr, ncols), np.float32)
    wf[np.ix_(np.arange(k), np.arange(Cin), cols)] = np.transpose(w, (2, 1, 0))
    bf = np.zeros((ncols,), np.float32)
    bf[cols] = b
    return dict(w=jnp.asarray(wf.reshape(k * cin_arr, ncols), jnp.bfloat16),
                b=jnp.asarray(bf.reshape(1, ncols), jnp.float32),
                k=k, act=act, cout=cout_block, ncols=ncols, glu_half=glu_half)


def prepare_params(params, cfg):
    """One-time: transpose / pad / cast weights to the kernel layouts (bf16)."""
    C = cfg["input_channels"]
    ch = cfg["conv_hidden_dim"]
    H = cfg["hidden_dim"]
    C_p = _round_up(C, 128)
    ch_p = _round_up(ch, 128)

    prep = {"C_p": C_p, "ch_p": ch_p}
    prep["input_conv"] = _prep_conv(params["input_w"], params["input_b"],
                                    cin_arr=C_p, act="none")
    convs = []
    cin_arr = C_p
    for lp in params["conv_layers"]:
        c1 = _prep_conv(lp["w1"], lp["b1"], cin_arr=cin_arr, act="relu")
        c2 = _prep_conv(lp["w2"], lp["b2"], cin_arr=ch_p, act="glu")
        convs.append((c1, c2))
        cin_arr = ch_p
    prep["convs"] = convs

    proj_w = np.zeros((ch_p, H), np.float32)
    proj_w[:ch] = np.asarray(params["proj_w"], np.float32).T
    prep["proj_w"] = jnp.asarray(proj_w, jnp.bfloat16)
    prep["proj_b"] = jnp.asarray(np.asarray(params["proj_b"]).reshape(1, H), jnp.float32)

    def row(v, n):
        return jnp.asarray(np.asarray(v, np.float32).reshape(1, n), jnp.float32)

    layers = []
    for ap in params["attn_layers"]:
        ipw = np.asarray(ap["in_proj_w"], np.float32)     # (3H, H)
        ipb = np.asarray(ap["in_proj_b"], np.float32)
        layers.append(dict(
            wq=jnp.asarray(ipw[:H].T, jnp.bfloat16),
            wk=jnp.asarray(ipw[H:2 * H].T, jnp.bfloat16),
            wv=jnp.asarray(ipw[2 * H:].T, jnp.bfloat16),
            bq=row(ipb[:H], H), bk=row(ipb[H:2 * H], H), bv=row(ipb[2 * H:], H),
            wo=jnp.asarray(np.asarray(ap["out_proj_w"], np.float32).T, jnp.bfloat16),
            bo=row(ap["out_proj_b"], H),
            w1=jnp.asarray(np.asarray(ap["lin1_w"], np.float32).T, jnp.bfloat16),
            b1=row(ap["lin1_b"], 2 * H),
            w2=jnp.asarray(np.asarray(ap["lin2_w"], np.float32).T, jnp.bfloat16),
            b2=row(ap["lin2_b"], H),
            ln1_g=row(ap["ln1_g"], H), ln1_b=row(ap["ln1_b"], H),
            ln2_g=row(ap["ln2_g"], H), ln2_b=row(ap["ln2_b"], H)))
    prep["attn_layers"] = layers

    prep["output_conv"] = _prep_conv(params["out_w"], params["out_b"],
                                     cin_arr=H, act="none")
    return prep


# ----------------------------- forward --------------------------------------------

def cleanspecnet_forward(prep, x_ncl, cfg):
    """x_ncl: (B, input_channels, T) — matches PyTorch Conv1d NCL convention."""
    assert cfg.get("stride", 1) == 1
    B, C, T = x_ncl.shape
    H = cfg["hidden_dim"]
    nh = cfg["num_heads"]
    kpad = cfg["kernel_size"] // 2
    C_p = prep["C_p"]

    # ---- conv stack (channel-padded, bf16, lane-dense) ----
    x = jnp.transpose(x_ncl, (0, 2, 1)).astype(jnp.float32)          # (B, T, C)
    x = jnp.pad(x, ((0, 0), (0, 0), (0, C_p - C)))                   # pad channels once
    x = conv1d_nlc(x, prep["input_conv"], padding=1)                 # (B, L, C_p) bf16
    for c1, c2 in prep["convs"]:
        x = conv1d_nlc(x, c1, padding=kpad)                          # ReLU conv
        x = conv1d_nlc(x, c2, padding=kpad)                          # GLU conv
    B_, L, chp = x.shape

    # ---- pad rows once for the whole attention stack ----
    t = min(256, _round_up(L, 8))                                    # attention / row tile
    Lp = _round_up(L, t)
    if Lp != L:
        x = jnp.pad(x, ((0, 0), (0, Lp - L), (0, 0)))
    M = B_ * Lp
    xr = x.reshape(M, chp)

    xf = linear(xr, prep["proj_w"], prep["proj_b"], tm=t, out_dtype=jnp.float32)

    for ap in prep["attn_layers"]:
        q, k, v = qkv_proj(xf, ap["wq"], ap["wk"], ap["wv"],
                           ap["bq"], ap["bk"], ap["bv"], tm=t)        # bf16 (M, H)
        o = causal_mha(q.reshape(B_, Lp, H), k.reshape(B_, Lp, H),
                       v.reshape(B_, Lp, H), nh, t)                   # bf16 (B, Lp, H)
        x1 = out_res_ln(o.reshape(M, H), ap["wo"], ap["bo"], xf,
                        ap["ln1_g"], ap["ln1_b"], tm=t)               # f32 (LN stream)
        xf = ffn_res_ln(x1, ap["w1"], ap["b1"], ap["w2"], ap["b2"],
                        ap["ln2_g"], ap["ln2_b"], tm=t)               # f32 (LN stream)

    xh = xf.reshape(B_, Lp, H)[:, :L, :]                              # drop row padding
    y = conv1d_nlc(xh, prep["output_conv"], padding=1,
                   out_dtype=jnp.float32)                             # (B, L2, C_pad)
    y = y[:, :, :C]
    if y.shape[1] != T:
        y = linear_interpolate_nlc(y, T)                              # (B, T, C)
    return jnp.transpose(y, (0, 2, 1))                                # (B, C, T)


# ----------------------------- test ------------------------------------------------

if __name__ == "__main__":
    cfg = dict(input_channels=16, num_conv_layers=2, kernel_size=4, stride=1,
               conv_hidden_dim=8, hidden_dim=32, num_attention_layers=2,
               num_heads=4, dropout=0.1)
    key = jax.random.PRNGKey(0)
    kp, kx = jax.random.split(key)
    params = init_cleanspecnet_params(kp, cfg)
    prep = prepare_params(params, cfg)                 # one-time weight prep (bf16)
    B, T = 2, 12
    x = jax.random.normal(kx, (B, cfg["input_channels"], T), jnp.float32)
    y = cleanspecnet_forward(prep, x, cfg)
    jax.block_until_ready(y)
    assert y.shape == (B, cfg["input_channels"], T), y.shape
    assert bool(jnp.all(jnp.isfinite(y)))
    print("KERNEL_OK")
</pallas_src>

<mosaic_0001>
module attributes {stable_mosaic.version = 11 : i64} {
  func.func @_conv1d_kernel(%arg0: i32, %arg1: i32, %arg2: memref<1x16x128xbf16, #tpu.memory_space<vmem>>, %arg3: memref<1x16x128xbf16, #tpu.memory_space<vmem>>, %arg4: memref<384x128xbf16, #tpu.memory_space<vmem>>, %arg5: memref<1x128xf32, #tpu.memory_space<vmem>>, %arg6: memref<1x16x128xbf16, #tpu.memory_space<vmem>>) attributes {dimension_semantics = [#tpu.dimension_semantics<parallel>, #tpu.dimension_semantics<parallel>], iteration_bounds = array<i64: 2, 1>, scalar_prefetch = 0 : i64, scratch_operands = 0 : i64, tpu.core_type = #tpu.core_type<tc>, window_params = [{transform_indices = @transform_0, window_bounds = array<i64: 1, 16, 128>}, {transform_indices = @transform_1, window_bounds = array<i64: 1, 16, 128>}, {pipeline_mode = #tpu.pipeline_mode<synchronous>, transform_indices = @transform_2, window_bounds = array<i64: 384, 128>}, {pipeline_mode = #tpu.pipeline_mode<synchronous>, transform_indices = @transform_3, window_bounds = array<i64: 1, 128>}, {transform_indices = @transform_4, window_bounds = array<i64: 1, 16, 128>}]} {
    %c0 = arith.constant 0 : index
    %c0_0 = arith.constant 0 : index
    %c0_1 = arith.constant 0 : index
    %0 = vector.load %arg2[%c0, %c0_0, %c0_1] : memref<1x16x128xbf16, #tpu.memory_space<vmem>>, vector<1x16x128xbf16>
    %1 = vector.shape_cast %0 : vector<1x16x128xbf16> to vector<16x128xbf16>
    %c0_2 = arith.constant 0 : index
    %c0_3 = arith.constant 0 : index
    %c0_4 = arith.constant 0 : index
    %2 = vector.load %arg3[%c0_2, %c0_3, %c0_4] : memref<1x16x128xbf16, #tpu.memory_space<vmem>>, vector<1x16x128xbf16>
    %3 = vector.shape_cast %2 : vector<1x16x128xbf16> to vector<16x128xbf16>
    %4 = tpu.concatenate %1, %3 in 0 : vector<16x128xbf16>, vector<16x128xbf16> -> vector<32x128xbf16>
    %5 = vector.extract_strided_slice %4 {offsets = [0, 0], sizes = [16, 128], strides = [1, 1]} : vector<32x128xbf16> to vector<16x128xbf16>
    %6 = vector.extract_strided_slice %4 {offsets = [1, 0], sizes = [16, 128], strides = [1, 1]} : vector<32x128xbf16> to vector<16x128xbf16>
    %7 = vector.extract_strided_slice %4 {offsets = [2, 0], sizes = [16, 128], strides = [1, 1]} : vector<32x128xbf16> to vector<16x128xbf16>
    %8 = tpu.concatenate %5, %6, %7 in 1 : vector<16x128xbf16>, vector<16x128xbf16>, vector<16x128xbf16> -> vector<16x384xbf16>
    %c0_5 = arith.constant 0 : index
    %c0_6 = arith.constant 0 : index
    %9 = vector.load %arg4[%c0_5, %c0_6] : memref<384x128xbf16, #tpu.memory_space<vmem>>, vector<384x128xbf16>
    %cst = arith.constant dense<0.000000e+00> : vector<16x128xf32>
    %10 = tpu.matmul %8, %9, %cst {dimension_numbers = #tpu.dot_dimension_numbers<[1], [0], [0], [1], [0, 0, 1, 1], [], []>} : vector<16x384xbf16>, vector<384x128xbf16>, vector<16x128xf32> -> vector<16x128xf32>
    %c0_7 = arith.constant 0 : index
    %c0_8 = arith.constant 0 : index
    %11 = vector.load %arg5[%c0_7, %c0_8] : memref<1x128xf32, #tpu.memory_space<vmem>>, vector<1x128xf32>
    %12 = vector.broadcast %11 : vector<1x128xf32> to vector<16x128xf32>
    %13 = arith.addf %10, %12 : vector<16x128xf32>
    %14 = arith.truncf %13 : vector<16x128xf32> to vector<16x128xbf16>
    %c0_9 = arith.constant 0 : index
    %c0_10 = arith.constant 0 : index
    %c0_11 = arith.constant 0 : index
    %15 = vector.load %arg6[%c0_9, %c0_10, %c0_11] : memref<1x16x128xbf16, #tpu.memory_space<vmem>>, vector<1x16x128xbf16>
    %16 = vector.shape_cast %15 : vector<1x16x128xbf16> to vector<16x128xbf16>
    %17 = vector.shape_cast %14 : vector<16x128xbf16> to vector<1x16x128xbf16>
    tpu.vector_store %arg6[%c0_9, %c0_10, %c0_11], %17 {strides = array<i32>} : memref<1x16x128xbf16, #tpu.memory_space<vmem>>, vector<1x16x128xbf16>,
    return
  }
  func.func @transform_0(%arg0: i32, %arg1: i32) -> (i32, i32, i32) {
    %c0_i32 = arith.constant 0 : i32
    %c0_i32_0 = arith.constant 0 : i32
    return %arg0, %arg1, %c0_i32 : i32, i32, i32
  }
  func.func @transform_1(%arg0: i32, %arg1: i32) -> (i32, i32, i32) {
    %c1_i32 = arith.constant 1 : i32
    %0 = arith.addi %arg1, %c1_i32 : i32
    %c0_i32 = arith.constant 0 : i32
    %c0_i32_0 = arith.constant 0 : i32
    return %arg0, %0, %c0_i32 : i32, i32, i32
  }
  func.func @transform_2(%arg0: i32, %arg1: i32) -> (i32, i32) {
    %c0_i32 = arith.constant 0 : i32
    %c0_i32_0 = arith.constant 0 : i32
    %c0_i32_1 = arith.constant 0 : i32
    return %c0_i32, %c0_i32_0 : i32, i32
  }
  func.func @transform_3(%arg0: i32, %arg1: i32) -> (i32, i32) {
    %c0_i32 = arith.constant 0 : i32
    %c0_i32_0 = arith.constant 0 : i32
    %c0_i32_1 = arith.constant 0 : i32
    return %c0_i32, %c0_i32_0 : i32, i32
  }
  func.func @transform_4(%arg0: i32, %arg1: i32) -> (i32, i32, i32) {
    %c0_i32 = arith.constant 0 : i32
    %c0_i32_0 = arith.constant 0 : i32
    return %arg0, %arg1, %c0_i32 : i32, i32, i32
  }
}

</mosaic_0001>

<llo_original>
// kernel: tpu_custom_call.1
$region0: #{tpu_custom_call.1}
  #allocation0 [shape = 'u32[]', space=smem, size = 0x4, offset = 0x4, fixed_abs, tag = 'smem constant byte address 0x4 - core index']
  #allocation1 [shape = 'u32[144,128]{1,0:T(1,128)}', space=vmem, size = 0x12000, scoped, tag = 'internal scratch']
  %s0 = inlined_call_operand.hbm [shape: bf16[2,32,128], index: 0, kind: input, shape index: {}]
  %s1 = inlined_call_operand.hbm [shape: bf16[2,32,128], index: 1, kind: input, shape index: {}]
  %s2 = inlined_call_operand.hbm [shape: bf16[384,128], index: 2, kind: input, shape index: {}]
  %s3 = inlined_call_operand.vmem [shape: f32[1,128], index: 3, kind: input, shape index: {}]
  %s4 = inlined_call_operand.hbm [shape: bf16[2,16,128], index: 4, kind: output, shape index: {}]
  %s5 = sld [smem:[#allocation0]]
  $region61: #{tpu_custom_call.1} parent=0
    _
  %s7 = ssub.s32 1, %s5
  %s8 = scalar_select 0, %s7, %s5
  $region1: #{tpu_custom_call.1} parent=0
    #allocation2 [shape = 'u8[8192]{0}', space=vmem, size = 0x2000, scoped, tag = 'input window, operand 0']
    #allocation3 [shape = 's32[2]{0}', space=sflag, size = 0x8, scoped, tag = 'scoped memory for tpu_custom_call.1']
    #allocation4 [shape = 's32[2]{0}', space=sflag, size = 0x8, scoped, tag = 'scoped memory for tpu_custom_call.1']
    #allocation5 [shape = 'u8[8192]{0}', space=vmem, size = 0x2000, scoped, tag = 'input window, operand 1']
    #allocation6 [shape = 's32[2]{0}', space=sflag, size = 0x8, scoped, tag = 'scoped memory for tpu_custom_call.1']
    #allocation7 [shape = 'u8[98304]{0}', space=vmem, size = 0x18000, scoped, tag = 'input window, operand 2, single buffered']
    #allocation8 [shape = 'u8[8192]{0}', space=vmem, size = 0x2000, scoped, tag = 'output window, operand 0']
    %9 = vsyncpa [#allocation3], 0
    %s10 = scalar_lea.sflag [#allocation3], 1
    %11 = vsyncpa %s10, 0
    %12 = vsyncpa [#allocation6], 0
    %s13 = scalar_lea.sflag [#allocation6], 1
    %14 = vsyncpa %s13, 0
    %15 = vsyncpa [#allocation4], 0
    %s16 = scalar_lea.sflag [#allocation4], 1
    %17 = vsyncpa %s16, 0
    loop: start=0, step=1, limit=4
    $region2: #{tpu_custom_call.1} parent=1 // loop_pre_header
      _
    $region3: #{tpu_custom_call.1} parent=1 // loop_header
      %s19 = sphi 0, %s23
      %p20 = scmp.ge.s32.totalorder %s19, 4
      %s26 = sphi 0, %s38
      %s27 = sphi 0, %s34
      %s28 = sphi 0, %s26
      %s29 = sphi 0, %s27
      %s30 = sphi 0, %s28
      %s31 = sphi 0, %s29
      %s43 = sphi 0, %s45
      %s46 = sphi 0, %s43
      %s47 = sphi 0, %s46
      %s63 = sphi 0, %s47
      %s73 = sphi 0, %s75
      %s76 = sphi 0, %s73
      %s77 = sphi 0, %s76
      %s93 = sphi 0, %s77
      %s97 = sphi 0, %s97
      %s99 = sphi 0, %s97
      %s100 = sphi 0, %s99
      %s114 = sphi 0, %s100
      %s118 = sphi 0, %s118
      %s120 = sphi 0, %s118
      %s121 = sphi 0, %s120
      %s135 = sphi 0, %s121
      %s143 = sphi 0, %s145
      %s146 = sphi 0, %s143
      %s147 = sphi 0, %s146
      %s163 = sphi 0, %s147
    $region4: #{tpu_custom_call.1} parent=1 // loop_header_branch
      %22 = sbr.rel (%p20) target = $region8
    $region5: #{tpu_custom_call.1} parent=1 // loop_body
      %s24 = ssub.s32 %s19, 1
      %s25 = ssub.s32 %s19, 2
      %s32 = sadd.s32 1, %s27
      %p33 = scmp.ge.s32.totalorder %s32, 1
      %s34 = scalar_select %p33, 0, %s32
      %s35 = sadd.s32 1, %s26
      %s36 = scalar_select %p33, %s35, %s26
      %p37 = scmp.ge.s32.totalorder %s36, 2
      %s38 = scalar_select %p37, 0, %s36
      %s39 = ssub.s32 %s26, %s38
      %s40 = ssub.s32 %s27, %s34
      %s41 = sor.u32 %s39, %s40
      %p42 = scmp.eq.s32.totalorder %s41, 0
      %s44 = sadd.s32 %s43, 1
      %s45 = scalar_select %p42, %s43, %s44
      %p48 = pneg %p42
      %p49 = scmp.eq.s32.totalorder %s19, 1
      %p50 = por %p48, %p49
      %p51 = scmp.ne.s32.totalorder %s43, %s46
      %p52 = scmp.eq.s32.totalorder %s19, 0
      %p53 = por %p51, %p52
      %p54 = scmp.ne.s32.totalorder %s43, %s46
      %p55 = scmp.eq.s32.totalorder %s24, 1
      %p56 = por %p54, %p55
      %p57 = scmp.ne.s32.totalorder %s46, %s47
      %p58 = scmp.eq.s32.totalorder %s24, 0
      %p59 = por %p57, %p58
      %p60 = scmp.ne.s32.totalorder %s46, %s47
      %p61 = scmp.eq.s32.totalorder %s25, 1
      %p62 = por %p60, %p61
      %p64 = scmp.ne.s32.totalorder %s47, %s63
      %p65 = scmp.eq.s32.totalorder %s25, 0
      %p66 = por %p64, %p65
      %s67 = sadd.s32 %s27, 1
      %s68 = sadd.s32 %s34, 1
      %s69 = ssub.s32 %s26, %s38
      %s70 = ssub.s32 %s67, %s68
      %s71 = sor.u32 %s69, %s70
      %p72 = scmp.eq.s32.totalorder %s71, 0
      %s74 = sadd.s32 %s73, 1
      %s75 = scalar_select %p72, %s73, %s74
      %p78 = pneg %p72
      %p79 = scmp.eq.s32.totalorder %s19, 1
      %p80 = por %p78, %p79
      %p81 = scmp.ne.s32.totalorder %s73, %s76
      %p82 = scmp.eq.s32.totalorder %s19, 0
      %p83 = por %p81, %p82
      %p84 = scmp.ne.s32.totalorder %s73, %s76
      %p85 = scmp.eq.s32.totalorder %s24, 1
      %p86 = por %p84, %p85
      %p87 = scmp.ne.s32.totalorder %s76, %s77
      %p88 = scmp.eq.s32.totalorder %s24, 0
      %p89 = por %p87, %p88
      %p90 = scmp.ne.s32.totalorder %s76, %s77
      %p91 = scmp.eq.s32.totalorder %s25, 1
      %p92 = por %p90, %p91
      %p94 = scmp.ne.s32.totalorder %s77, %s93
      %p95 = scmp.eq.s32.totalorder %s25, 0
      %p96 = por %p94, %p95
      %s98 = sadd.s32 %s97, 1
      %p101 = scmp.eq.s32.totalorder %s19, 1
      %p102 = scmp.ne.s32.totalorder %s97, %s99
      %p103 = scmp.eq.s32.totalorder %s19, 0
      %p104 = por %p102, %p103
      %p105 = scmp.ne.s32.totalorder %s97, %s99
      %p106 = scmp.eq.s32.totalorder %s24, 1
      %p107 = por %p105, %p106
      %p108 = scmp.ne.s32.totalorder %s99, %s100
      %p109 = scmp.eq.s32.totalorder %s24, 0
      %p110 = por %p108, %p109
      %p111 = scmp.ne.s32.totalorder %s99, %s100
      %p112 = scmp.eq.s32.totalorder %s25, 1
      %p113 = por %p111, %p112
      %p115 = scmp.ne.s32.totalorder %s100, %s114
      %p116 = scmp.eq.s32.totalorder %s25, 0
      %p117 = por %p115, %p116
      %s119 = sadd.s32 %s118, 1
      %p122 = scmp.eq.s32.totalorder %s19, 1
      %p123 = scmp.ne.s32.totalorder %s118, %s120
      %p124 = scmp.eq.s32.totalorder %s19, 0
      %p125 = por %p123, %p124
      %p126 = scmp.ne.s32.totalorder %s118, %s120
      %p127 = scmp.eq.s32.totalorder %s24, 1
      %p128 = por %p126, %p127
      %p129 = scmp.ne.s32.totalorder %s120, %s121
      %p130 = scmp.eq.s32.totalorder %s24, 0
      %p131 = por %p129, %p130
      %p132 = scmp.ne.s32.totalorder %s120, %s121
      %p133 = scmp.eq.s32.totalorder %s25, 1
      %p134 = por %p132, %p133
      %p136 = scmp.ne.s32.totalorder %s121, %s135
      %p137 = scmp.eq.s32.totalorder %s25, 0
      %p138 = por %p136, %p137
      %s139 = ssub.s32 %s26, %s38
      %s140 = ssub.s32 %s27, %s34
      %s141 = sor.u32 %s139, %s140
      %p142 = scmp.eq.s32.totalorder %s141, 0
      %s144 = sadd.s32 %s143, 1
      %s145 = scalar_select %p142, %s143, %s144
      %p148 = pneg %p142
      %p149 = scmp.eq.s32.totalorder %s19, 1
      %p150 = por %p148, %p149
      %p151 = scmp.ne.s32.totalorder %s143, %s146
      %p152 = scmp.eq.s32.totalorder %s19, 0
      %p153 = por %p151, %p152
      %p154 = scmp.ne.s32.totalorder %s143, %s146
      %p155 = scmp.eq.s32.totalorder %s24, 1
      %p156 = por %p154, %p155
      %p157 = scmp.ne.s32.totalorder %s146, %s147
      %p158 = scmp.eq.s32.totalorder %s24, 0
      %p159 = por %p157, %p158
      %p160 = scmp.ne.s32.totalorder %s146, %s147
      %p161 = scmp.eq.s32.totalorder %s25, 1
      %p162 = por %p160, %p161
      %p164 = scmp.ne.s32.totalorder %s147, %s163
      %p165 = scmp.eq.s32.totalorder %s25, 0
      %p166 = por %p164, %p165
      %p167 = scmp.le.s32.totalorder 1, %s19
      %p168 = scmp.lt.s32.totalorder %s19, 3
      %p169 = pnand %p167, %p168
      %p170 = pneg %p169
      // Predicated region
      $region9: #{tpu_custom_call.1} parent=5 // pred_check
        _
      $region10: #{tpu_custom_call.1} parent=5 // pred_check_branch
        %172 = sbr.rel (%p169) target = $region12
      $region11: #{tpu_custom_call.1} parent=5 // pred_region
        %s173 = ssub.s32 %s19, 1
        // Predicated region
        $region13: #{tpu_custom_call.1} parent=11 // pred_check
          %p174 = pneg %p110
        $region14: #{tpu_custom_call.1} parent=11 // pred_check_branch
          %176 = sbr.rel (%p174) target = $region16
        $region15: #{tpu_custom_call.1} parent=11 // pred_region
          %s178 = ssub.s32 3072, 3072
          %179 = vsyncadd [#allocation6], %s178
          %s180 = sshll.u32 [#allocation7], 4
          %s181 = int_to_ptr.vmem [resolvable:$true] %s180
          %186 = dma.hbm_to_vmem [thread:$0]  %s2, 3072, %s181, [#allocation6], 64, 64, 4
        $region16: #{tpu_custom_call.1} parent=11 // pred_fallthru
          _
        // Predicated region
        $region17: #{tpu_custom_call.1} parent=11 // pred_check
          %p187 = pneg %p131
        $region18: #{tpu_custom_call.1} parent=11 // pred_check_branch
          %189 = sbr.rel (%p187) target = $region20
        $region19: #{tpu_custom_call.1} parent=11 // pred_region
          _
        $region20: #{tpu_custom_call.1} parent=11 // pred_fallthru
          _
      $region12: #{tpu_custom_call.1} parent=5 // pred_fallthru
        _
      %p190 = scmp.lt.s32.totalorder %s19, 2
      // Predicated region
      $region21: #{tpu_custom_call.1} parent=5 // pred_check
        %p191 = pneg %p190
      $region22: #{tpu_custom_call.1} parent=5 // pred_check_branch
        %193 = sbr.rel (%p191) target = $region24
      $region23: #{tpu_custom_call.1} parent=5 // pred_region
        // Predicated region
        $region25: #{tpu_custom_call.1} parent=23 // pred_check
          %p194 = pneg %p53
        $region26: #{tpu_custom_call.1} parent=23 // pred_check_branch
          %196 = sbr.rel (%p194) target = $region28
        $region27: #{tpu_custom_call.1} parent=23 // pred_region
          %s197 = sand.u32 %s43, 1
          %s198 = scalar_lea.sflag [#allocation3], %s197
          %s199 = sand.u32 %s43, 1
          %s200 = smul.addr %s199, 8
          %s201 = scalar_lea.vmem [#allocation2], %s200
          %s202 = smul.u32 2, %s27
          %s204 = ssub.s32 128, 128
          %205 = vsyncadd %s198, %s204
          %s206 = smul.addr %s26, 4
          %s207 = sadd.s32 %s202, %s206
          %s208 = smul.addr %s207, 64
          %s209 = scalar_lea.hbm %s0, %s208
          %s210 = sshll.u32 %s201, 4
          %s211 = int_to_ptr.vmem [resolvable:$true] %s210
          %216 = dma.hbm_to_vmem [thread:$0]  %s209, 128, %s211, %s198, 64, 64, 4
        $region28: #{tpu_custom_call.1} parent=23 // pred_fallthru
          _
        // Predicated region
        $region29: #{tpu_custom_call.1} parent=23 // pred_check
          %p217 = pneg %p83
        $region30: #{tpu_custom_call.1} parent=23 // pred_check_branch
          %219 = sbr.rel (%p217) target = $region32
        $region31: #{tpu_custom_call.1} parent=23 // pred_region
          %s220 = sand.u32 %s19, 1
          %s221 = scalar_lea.sflag [#allocation6], %s220
          %s222 = sand.u32 %s73, 1
          %s223 = smul.addr %s222, 8
          %s224 = scalar_lea.vmem [#allocation5], %s223
          %s225 = sadd.s32 %s27, 1
          %s226 = smul.u32 2, %s225
          %s228 = ssub.s32 128, 128
          %229 = vsyncadd %s221, %s228
          %s230 = smul.addr %s26, 4
          %s231 = sadd.s32 %s226, %s230
          %s232 = smul.addr %s231, 64
          %s233 = scalar_lea.hbm %s1, %s232
          %s234 = sshll.u32 %s224, 4
          %s235 = int_to_ptr.vmem [resolvable:$true] %s234
          %240 = dma.hbm_to_vmem [thread:$0]  %s233, 128, %s235, %s221, 64, 64, 4
        $region32: #{tpu_custom_call.1} parent=23 // pred_fallthru
          _
      $region24: #{tpu_custom_call.1} parent=5 // pred_fallthru
        _
      %p241 = scmp.le.s32.totalorder 1, %s19
      %p242 = scmp.lt.s32.totalorder %s19, 3
      %p243 = pnand %p241, %p242
      %p244 = pneg %p243
      // Predicated region
      $region33: #{tpu_custom_call.1} parent=5 // pred_check
        _
      $region34: #{tpu_custom_call.1} parent=5 // pred_check_branch
        %246 = sbr.rel (%p243) target = $region36
      $region35: #{tpu_custom_call.1} parent=5 // pred_region
        %s247 = ssub.s32 %s19, 1
        %s248 = sand.u32 %s46, 1
        %s249 = scalar_lea.sflag [#allocation3], %s248
        %s250 = sand.u32 %s46, 1
        %s251 = smul.addr %s250, 8
        %s252 = scalar_lea.vmem [#allocation2], %s251
        // Predicated region
        $region37: #{tpu_custom_call.1} parent=35 // pred_check
          %p253 = pneg %p59
        $region38: #{tpu_custom_call.1} parent=35 // pred_check_branch
          %255 = sbr.rel (%p253) target = $region40
        $region39: #{tpu_custom_call.1} parent=35 // pred_region
          %256 = dma.done %s249, 128
        $region40: #{tpu_custom_call.1} parent=35 // pred_fallthru
          _
        %s257 = sand.u32 %s24, 1
        %s258 = scalar_lea.sflag [#allocation6], %s257
        %s259 = sand.u32 %s76, 1
        %s260 = smul.addr %s259, 8
        %s261 = scalar_lea.vmem [#allocation5], %s260
        // Predicated region
        $region41: #{tpu_custom_call.1} parent=35 // pred_check
          %p262 = pneg %p89
        $region42: #{tpu_custom_call.1} parent=35 // pred_check_branch
          %264 = sbr.rel (%p262) target = $region44
        $region43: #{tpu_custom_call.1} parent=35 // pred_region
          %265 = dma.done %s258, 128
        $region44: #{tpu_custom_call.1} parent=35 // pred_fallthru
          _
        // Predicated region
        $region45: #{tpu_custom_call.1} parent=35 // pred_check
          %p266 = pneg %p110
        $region46: #{tpu_custom_call.1} parent=35 // pred_check_branch
          %268 = sbr.rel (%p266) target = $region48
        $region47: #{tpu_custom_call.1} parent=35 // pred_region
          %269 = dma.done [#allocation6], 3072
        $region48: #{tpu_custom_call.1} parent=35 // pred_fallthru
          _
        %s270 = sand.u32 %s46, 1
        %s271 = scalar_lea.sflag [#allocation3], %s270
        %s272 = sand.u32 %s46, 1
        %s273 = smul.addr %s272, 8
        %s274 = scalar_lea.vmem [#allocation2], %s273
        %p275 = pneg %p59
        %p276 = pneg %p56
        %s277 = sand.u32 %s24, 1
        %s278 = scalar_lea.sflag [#allocation6], %s277
        %s279 = sand.u32 %s76, 1
        %s280 = smul.addr %s279, 8
        %s281 = scalar_lea.vmem [#allocation5], %s280
        %p282 = pneg %p89
        %p283 = pneg %p86
        %p284 = pneg %p110
        %p285 = pneg %p107
        %p286 = pneg %p131
        %p287 = pneg %p128
        %p288 = pneg %p159
        %p289 = pneg %p156
        %s290 = sand.u32 %s146, 1
        %s291 = scalar_lea.sflag [#allocation4], %s290
        %s292 = sand.u32 %s146, 1
        %s293 = smul.addr %s292, 8
        %s294 = scalar_lea.vmem [#allocation8], %s293
        %s295 = smul.u32 2, %s29
        %s296 = sadd.s32 %s29, 1
        %s297 = smul.u32 2, %s296
        %s298 = smul.u32 2, %s29
        %v300 = vld [vmem:[%s252] sm:$0xf]
        %v301 = vld [vmem:[%s252 + $0x4] sm:$0xf]
        %v302 = vld [vmem:[%s261] sm:$0xf]
        %v303 = vld [vmem:[%s261 + $0x4] sm:$0xf]
        %v306 = vunpack.c.l.b16 %v300
        %v307 = vunpack.c.l.b16 %v301
        %v308 = vpack.c.b16 %v307, %v306
        %v312 = vunpack.c.l.b16 %v302
        %v313 = vunpack.c.l.b16 %v303
        %v314 = vpack.c.b16 %v313, %v312
        %vm315 = vsmask.f32 7424
        %v317 = vshrl.u32 %v308, 16
        %v319 = vshll.u32 %v308, 16
        %v321 = vrot.slane %v319, 1
        %v322 = vor.u32 %v317, %v321
        %v324 = vshll.u32 %v314, 16
        %v326 = vrot.slane %v324, 1
        %v327 = vsel %vm315, %v322, %v326
        %vm329 = vcmask 1046528
        %v330 = vrot.slane %v308, 1
        %v331 = vrot.slane %v314, 1
        %v332 = vsel %vm329, %v330, %v331
        %v334 = vld [vmem:[#allocation7] sm:$0xf]
        %v335 = vld [vmem:[#allocation7 + $0x4] sm:$0xf]
        %v336 = vld [vmem:[#allocation7 + $0x8] sm:$0xf]
        %v337 = vld [vmem:[#allocation7 + $0xc] sm:$0xf]
        %v338 = vld [vmem:[#allocation7 + $0x10] sm:$0xf]
        %v339 = vld [vmem:[#allocation7 + $0x14] sm:$0xf]
        %v340 = vld [vmem:[#allocation7 + $0x18] sm:$0xf]
        %v341 = vld [vmem:[#allocation7 + $0x1c] sm:$0xf]
        %v342 = vld [vmem:[#allocation7 + $0x20] sm:$0xf]
        %v343 = vld [vmem:[#allocation7 + $0x24] sm:$0xf]
        %v344 = vld [vmem:[#allocation7 + $0x28] sm:$0xf]
        %v345 = vld [vmem:[#allocation7 + $0x2c] sm:$0xf]
        %v346 = vld [vmem:[#allocation7 + $0x30] sm:$0xf]
        %v347 = vld [vmem:[#allocation7 + $0x34] sm:$0xf]
        %v348 = vld [vmem:[#allocation7 + $0x38] sm:$0xf]
        %v349 = vld [vmem:[#allocation7 + $0x3c] sm:$0xf]
        %v350 = vld [vmem:[#allocation7 + $0x40] sm:$0xf]
        %v351 = vld [vmem:[#allocation7 + $0x44] sm:$0xf]
        %v352 = vld [vmem:[#allocation7 + $0x48] sm:$0xf]
        %v353 = vld [vmem:[#allocation7 + $0x4c] sm:$0xf]
        %v354 = vld [vmem:[#allocation7 + $0x50] sm:$0xf]
        %v355 = vld [vmem:[#allocation7 + $0x54] sm:$0xf]
        %v356 = vld [vmem:[#allocation7 + $0x58] sm:$0xf]
        %v357 = vld [vmem:[#allocation7 + $0x5c] sm:$0xf]
        %v358 = vld [vmem:[#allocation7 + $0x60] sm:$0xf]
        %v359 = vld [vmem:[#allocation7 + $0x64] sm:$0xf]
        %v360 = vld [vmem:[#allocation7 + $0x68] sm:$0xf]
        %v361 = vld [vmem:[#allocation7 + $0x6c] sm:$0xf]
        %v362 = vld [vmem:[#allocation7 + $0x70] sm:$0xf]
        %v363 = vld [vmem:[#allocation7 + $0x74] sm:$0xf]
        %v364 = vld [vmem:[#allocation7 + $0x78] sm:$0xf]
        %v365 = vld [vmem:[#allocation7 + $0x7c] sm:$0xf]
        %v366 = vld [vmem:[#allocation7 + $0x80] sm:$0xf]
        %v367 = vld [vmem:[#allocation7 + $0x84] sm:$0xf]
        %v368 = vld [vmem:[#allocation7 + $0x88] sm:$0xf]
        %v369 = vld [vmem:[#allocation7 + $0x8c] sm:$0xf]
        %v370 = vld [vmem:[#allocation7 + $0x90] sm:$0xf]
        %v371 = vld [vmem:[#allocation7 + $0x94] sm:$0xf]
        %v372 = vld [vmem:[#allocation7 + $0x98] sm:$0xf]
        %v373 = vld [vmem:[#allocation7 + $0x9c] sm:$0xf]
        %v374 = vld [vmem:[#allocation7 + $0xa0] sm:$0xf]
        %v375 = vld [vmem:[#allocation7 + $0xa4] sm:$0xf]
        %v376 = vld [vmem:[#allocation7 + $0xa8] sm:$0xf]
        %v377 = vld [vmem:[#allocation7 + $0xac] sm:$0xf]
        %v378 = vld [vmem:[#allocation7 + $0xb0] sm:$0xf]
        %v379 = vld [vmem:[#allocation7 + $0xb4] sm:$0xf]
        %v380 = vld [vmem:[#allocation7 + $0xb8] sm:$0xf]
        %v381 = vld [vmem:[#allocation7 + $0xbc] sm:$0xf]
        %v382 = vld [vmem:[%s3] sm:$0x1]
        %v384 = vlaneseq
        %v385 = vshrl.u32 %v384, 7
        %v386 = vsub.s32 0, %v385
        %v387 = vrot.slane %v382, %v386
        %v437 = vunpack.c.l.b16 %v334
        %v438 = vunpack.c.l.b16 %v335
        %v439 = vunpack.c.l.b16 %v336
        %v440 = vunpack.c.l.b16 %v337
        %v441 = vunpack.c.l.b16 %v338
        %v442 = vunpack.c.l.b16 %v339
        %v443 = vunpack.c.l.b16 %v340
        %v444 = vunpack.c.l.b16 %v341
        %v445 = vunpack.c.l.b16 %v342
        %v446 = vunpack.c.l.b16 %v343
        %v447 = vunpack.c.l.b16 %v344
        %v448 = vunpack.c.l.b16 %v345
        %v449 = vunpack.c.l.b16 %v346
        %v450 = vunpack.c.l.b16 %v347
        %v451 = vunpack.c.l.b16 %v348
        %v452 = vunpack.c.l.b16 %v349
        %v453 = vunpack.c.l.b16 %v350
        %v454 = vunpack.c.l.b16 %v351
        %v455 = vunpack.c.l.b16 %v352
        %v456 = vunpack.c.l.b16 %v353
        %v457 = vunpack.c.l.b16 %v354
        %v458 = vunpack.c.l.b16 %v355
        %v459 = vunpack.c.l.b16 %v356
        %v460 = vunpack.c.l.b16 %v357
        %v461 = vunpack.c.l.b16 %v358
        %v462 = vunpack.c.l.b16 %v359
        %v463 = vunpack.c.l.b16 %v360
        %v464 = vunpack.c.l.b16 %v361
        %v465 = vunpack.c.l.b16 %v362
        %v466 = vunpack.c.l.b16 %v363
        %v467 = vunpack.c.l.b16 %v364
        %v468 = vunpack.c.l.b16 %v365
        %v469 = vunpack.c.l.b16 %v366
        %v470 = vunpack.c.l.b16 %v367
        %v471 = vunpack.c.l.b16 %v368
        %v472 = vunpack.c.l.b16 %v369
        %v473 = vunpack.c.l.b16 %v370
        %v474 = vunpack.c.l.b16 %v371
        %v475 = vunpack.c.l.b16 %v372
        %v476 = vunpack.c.l.b16 %v373
        %v477 = vunpack.c.l.b16 %v374
        %v478 = vunpack.c.l.b16 %v375
        %v479 = vunpack.c.l.b16 %v376
        %v480 = vunpack.c.l.b16 %v377
        %v481 = vunpack.c.l.b16 %v378
        %v482 = vunpack.c.l.b16 %v379
        %v483 = vunpack.c.l.b16 %v380
        %v484 = vunpack.c.l.b16 %v381
        %v485 = vpack.c.b16 %v438, %v437
        %v486 = vpack.c.b16 %v440, %v439
        %v487 = vpack.c.b16 %v442, %v441
        %v488 = vpack.c.b16 %v444, %v443
        %v489 = vpack.c.b16 %v446, %v445
        %v490 = vpack.c.b16 %v448, %v447
        %v491 = vpack.c.b16 %v450, %v449
        %v492 = vpack.c.b16 %v452, %v451
        %v493 = vpack.c.b16 %v454, %v453
        %v494 = vpack.c.b16 %v456, %v455
        %v495 = vpack.c.b16 %v458, %v457
        %v496 = vpack.c.b16 %v460, %v459
        %v497 = vpack.c.b16 %v462, %v461
        %v498 = vpack.c.b16 %v464, %v463
        %v499 = vpack.c.b16 %v466, %v465
        %v500 = vpack.c.b16 %v468, %v467
        %v501 = vpack.c.b16 %v470, %v469
        %v502 = vpack.c.b16 %v472, %v471
        %v503 = vpack.c.b16 %v474, %v473
        %v504 = vpack.c.b16 %v476, %v475
        %v505 = vpack.c.b16 %v478, %v477
        %v506 = vpack.c.b16 %v480, %v479
        %v507 = vpack.c.b16 %v482, %v481
        %v508 = vpack.c.b16 %v484, %v483
        %533 = vmatprep.subr.bf16.mxu0 0
        %534 = vmatpush1.bf16.msra.mxu0 %v492
        %535 = vmatprep.subr.bf16.mxu0 0
        %536 = vmatpush1.bf16.msra.mxu0 %v491
        %537 = vmatprep.subr.bf16.mxu0 0
        %538 = vmatpush1.bf16.msra.mxu0 %v490
        %539 = vmatprep.subr.bf16.mxu0 0
        %540 = vmatpush1.bf16.msra.mxu0 %v489
        %541 = vmatprep.subr.bf16.mxu0 0
        %542 = vmatpush1.bf16.msra.mxu0 %v488
        %543 = vmatprep.subr.bf16.mxu0 0
        %544 = vmatpush1.bf16.msra.mxu0 %v487
        %545 = vmatprep.subr.bf16.mxu0 0
        %546 = vmatpush1.bf16.msra.mxu0 %v486
        %547 = vmatprep.subr.bf16.mxu0 0
        %548 = vmatpush1.bf16.msra.mxu0 %v485
        %549 = vmatprep.subr.bf16.mxu0 0
        %550 = vmatpush2.bf16.msra.mxu0 %v500
        %551 = vmatprep.subr.bf16.mxu0 0
        %552 = vmatpush2.bf16.msra.mxu0 %v499
        %553 = vmatprep.subr.bf16.mxu0 0
        %554 = vmatpush2.bf16.msra.mxu0 %v498
        %555 = vmatprep.subr.bf16.mxu0 0
        %556 = vmatpush2.bf16.msra.mxu0 %v497
        %557 = vmatprep.subr.bf16.mxu0 0
        %558 = vmatpush2.bf16.msra.mxu0 %v496
        %559 = vmatprep.subr.bf16.mxu0 0
        %560 = vmatpush2.bf16.msra.mxu0 %v495
        %561 = vmatprep.subr.bf16.mxu0 0
        %562 = vmatpush2.bf16.msra.mxu0 %v494
        %563 = vmatprep.subr.bf16.mxu0 0
        %564 = vmatpush2.bf16.msra.mxu0 %v493
        %565 = vmatprep.mubr.bf16.mxu0 %v327
        %566 = vmatmul.mubr.bf16.gmra.mxu0 %v308
        %v567 = vpop.f32.mrf.mxu0
        %v568 = vadd.f32 %v387, %v567
        %v569 = vpop.f32.mrf.mxu0
        %v570 = vpop.f32.mrf.mxu0
        %v571 = vadd.f32 %v387, %v570
        %v572 = vpop.f32.mrf.mxu0
        %573 = vdwg.mxu0
        %574 = vmatprep.subr.bf16.mxu0 0
        %575 = vmatpush1.bf16.msra.mxu0 %v508
        %576 = vmatprep.subr.bf16.mxu0 0
        %577 = vmatpush1.bf16.msra.mxu0 %v507
        %578 = vmatprep.subr.bf16.mxu0 0
        %579 = vmatpush1.bf16.msra.mxu0 %v506
        %580 = vmatprep.subr.bf16.mxu0 0
        %581 = vmatpush1.bf16.msra.mxu0 %v505
        %582 = vmatprep.subr.bf16.mxu0 0
        %583 = vmatpush1.bf16.msra.mxu0 %v504
        %584 = vmatprep.subr.bf16.mxu0 0
        %585 = vmatpush1.bf16.msra.mxu0 %v503
        %586 = vmatprep.subr.bf16.mxu0 0
        %587 = vmatpush1.bf16.msra.mxu0 %v502
        %588 = vmatprep.subr.bf16.mxu0 0
        %589 = vmatpush1.bf16.msra.mxu0 %v501
        %590 = vmatprep.subr.bf16.mxu0 0
        %591 = vmatpush2.bf16.msra.mxu0 0
        %592 = vmatprep.subr.bf16.mxu0 0
        %593 = vmatpush2.bf16.msra.mxu0 0
        %594 = vmatprep.subr.bf16.mxu0 0
        %595 = vmatpush2.bf16.msra.mxu0 0
        %596 = vmatprep.subr.bf16.mxu0 0
        %597 = vmatpush2.bf16.msra.mxu0 0
        %598 = vmatprep.subr.bf16.mxu0 0
        %599 = vmatpush2.bf16.msra.mxu0 0
        %600 = vmatprep.subr.bf16.mxu0 0
        %601 = vmatpush2.bf16.msra.mxu0 0
        %602 = vmatprep.subr.bf16.mxu0 0
        %603 = vmatpush2.bf16.msra.mxu0 0
        %604 = vmatprep.subr.bf16.mxu0 0
        %605 = vmatpush2.bf16.msra.mxu0 0
        %606 = vmatprep.mubr.bf16.mxu0 0
        %607 = vmatmul.mubr.bf16.gmra.mxu0 %v332
        %v608 = vpop.f32.mrf.mxu0
        %v609 = vadd.f32 %v568, %v608
        %v610 = vpop.f32.mrf.mxu0
        %v611 = vpop.f32.mrf.mxu0
        %v612 = vadd.f32 %v571, %v611
        %v613 = vpop.f32.mrf.mxu0
        %614 = vdwg.mxu0
        %v615 = vpack.c.bf16 %v612, %v609
        %v617 = vunpack.c.l.b16 %v615
        %v618 = vunpack.c.h.b16 %v615
        %v619 = vpack.c.b16 %v617, %v617
        %v620 = vpack.c.b16 %v618, %v618
        %623 = vst [vmem:[%s294] sm:$0xf] %v619
        %624 = vst [vmem:[%s294 + $0x4] sm:$0xf] %v620
        %s625 = sand.u32 %s146, 1
        %s626 = scalar_lea.sflag [#allocation4], %s625
        %s627 = sand.u32 %s146, 1
        %s628 = smul.addr %s627, 8
        %s629 = scalar_lea.vmem [#allocation8], %s628
        // Predicated region
        $region49: #{tpu_custom_call.1} parent=35 // pred_check
          %p630 = pneg %p156
        $region50: #{tpu_custom_call.1} parent=35 // pred_check_branch
          %632 = sbr.rel (%p630) target = $region52
        $region51: #{tpu_custom_call.1} parent=35 // pred_region
          %s633 = smul.u32 2, %s29
          %s635 = ssub.s32 128, 128
          %636 = vsyncadd %s626, %s635
          %s637 = smul.addr %s28, 2
          %s638 = sadd.s32 %s633, %s637
          %s639 = smul.addr %s638, 64
          %s640 = scalar_lea.hbm %s4, %s639
          %s641 = sshll.u32 %s629, 4
          %s642 = int_to_ptr.vmem [resolvable:$true] %s641
          %647 = dma.vmem_to_hbm [thread:$0]  %s642, 128, %s640, %s626, 64, 64, 4
        $region52: #{tpu_custom_call.1} parent=35 // pred_fallthru
          _
      $region36: #{tpu_custom_call.1} parent=5 // pred_fallthru
        _
      %p648 = scmp.le.s32.totalorder 2, %s19
      // Predicated region
      $region53: #{tpu_custom_call.1} parent=5 // pred_check
        %p649 = pneg %p648
      $region54: #{tpu_custom_call.1} parent=5 // pred_check_branch
        %651 = sbr.rel (%p649) target = $region56
      $region55: #{tpu_custom_call.1} parent=5 // pred_region
        %s652 = ssub.s32 %s19, 2
        // Predicated region
        $region57: #{tpu_custom_call.1} parent=55 // pred_check
          %p653 = pneg %p162
        $region58: #{tpu_custom_call.1} parent=55 // pred_check_branch
          %655 = sbr.rel (%p653) target = $region60
        $region59: #{tpu_custom_call.1} parent=55 // pred_region
          %s656 = sand.u32 %s147, 1
          %s657 = scalar_lea.sflag [#allocation4], %s656
          %s658 = sand.u32 %s147, 1
          %s659 = smul.addr %s658, 8
          %s660 = scalar_lea.vmem [#allocation8], %s659
          %661 = dma.done %s657, 128
        $region60: #{tpu_custom_call.1} parent=55 // pred_fallthru
          _
      $region56: #{tpu_custom_call.1} parent=5 // pred_fallthru
        _
    $region6: #{tpu_custom_call.1} parent=1 // loop_footer
      %s23 = sadd.s32 1, %s19
    $region7: #{tpu_custom_call.1} parent=1 // loop_footer_branch
      %18 = sbr.rel target = $region3
    $region8: #{tpu_custom_call.1} parent=1 // loop_exit
      _
    %662 = vsyncpa [#allocation3], 1
    %s663 = scalar_lea.sflag [#allocation3], 1
    %664 = vsyncpa %s663, 1
    %665 = vsyncpa [#allocation6], 1
    %s666 = scalar_lea.sflag [#allocation6], 1
    %667 = vsyncpa %s666, 1
    %668 = vsyncpa [#allocation4], 1
    %s669 = scalar_lea.sflag [#allocation4], 1
    %670 = vsyncpa %s669, 1

</llo_original>
